<compile_context>
chip_gen: v7x
topology: tpu7x:2x2x1
jax: 0.10.0
libtpu: 0.0.40
codegen_flags: <defaults>
</compile_context>

<pallas_src>
import functools

import jax
import jax.numpy as jnp
from jax import lax
from jax.experimental import pallas as pl
from jax.experimental.pallas import tpu as pltpu


def _subconv_kernel(idx_ref, x_ref, w_ref, o_ref, xp_ref, *, H, W, KH, KW, PAD):
    """One batch element per grid step.

    idx_ref : (1,) int32 in SMEM      selected sub-conv index (consumed by index_maps)
    x_ref   : (1, Cin, H*W)           unpadded input image, H*W lane-dense
    w_ref   : (1, Cout, KH*KW*Cin)    selected bank entry (bf16), K order = (kh, kw, cin)
    o_ref   : (1, Cout, Ho*Wo)        output, lane-dense (Ho*Wo = 256)
    xp_ref  : (Cin, Hp*Wp) f32 VMEM   scratch: zero-padded image, rows flattened into lanes
    """
    del idx_ref  # only used by the BlockSpec index_maps
    Cin = x_ref.shape[1]
    Hp, Wp = H + 2 * PAD, W + 2 * PAD
    Ho, Wo = Hp - KH + 1, Wp - KW + 1
    L = (Ho - 1) * Wp + Wo  # "wide" row length: covers every valid tap window, stays in bounds

    # ---- in-kernel zero padding (replaces wrapper-side jnp.pad HBM roundtrip) ----
    xp_ref[...] = jnp.zeros_like(xp_ref)
    xs = x_ref[0]                                            # (Cin, H*W) f32
    for h in range(H):
        dst = (h + PAD) * Wp + PAD
        xp_ref[:, dst:dst + W] = xs[:, h * W:(h + 1) * W]
    xp = xp_ref[...].astype(jnp.bfloat16)                    # (Cin, Hp*Wp) bf16 MXU operand

    # ---- implicit im2col: each tap is a pure lane-offset slice of the flat padded image ----
    patches = []
    for kh in range(KH):
        for kw in range(KW):
            off = kh * Wp + kw
            patches.append(xp[:, off:off + L])               # (Cin, L)
    p = jnp.concatenate(patches, axis=0)                     # (KH*KW*Cin, L)

    # ---- single MXU matmul: bf16 operands, f32 accumulation ----
    acc = jnp.dot(w_ref[0], p, preferred_element_type=jnp.float32)   # (Cout, L) f32

    # ---- drop the KW-1 junk columns per output row; one full-width lane-dense store ----
    rows = [acc[:, ho * Wp: ho * Wp + Wo] for ho in range(Ho)]
    out = jnp.concatenate(rows, axis=1)                      # (Cout, Ho*Wo)
    o_ref[0] = out.astype(o_ref.dtype)


def prepare_weight_bank(weight_bank):
    """One-time (init) layout of the shared bank:
    (N, Cout, Cin, KH, KW) -> (N, Cout, KH*KW*Cin) bf16, matching the kernel's im2col order."""
    N, Cout, Cin, KH, KW = weight_bank.shape
    w = jnp.transpose(weight_bank, (0, 1, 3, 4, 2)).reshape(N, Cout, KH * KW * Cin)
    return w.astype(jnp.bfloat16)


def subconv_forward(x_nchw, w_bank_prepped, index, *, KH=3, KW=3, padding=1):
    """Apply the `index`-th convolution of the shared bank to x (NCHW in, NCHW out)."""
    B, Cin, H, W = x_nchw.shape
    N, Cout, K = w_bank_prepped.shape
    assert K == KH * KW * Cin
    Hp, Wp = H + 2 * padding, W + 2 * padding
    Ho, Wo = Hp - KH + 1, Wp - KW + 1

    x_flat = x_nchw.reshape(B, Cin, H * W)          # free contiguous reshape, no transpose/pad
    idx = jnp.asarray([index], dtype=jnp.int32)     # scalar-prefetch operand

    kernel = functools.partial(_subconv_kernel, H=H, W=W, KH=KH, KW=KW, PAD=padding)
    out_flat = pl.pallas_call(
        kernel,
        out_shape=jax.ShapeDtypeStruct((B, Cout, Ho * Wo), x_nchw.dtype),
        grid_spec=pltpu.PrefetchScalarGridSpec(
            num_scalar_prefetch=1,
            grid=(B,),
            in_specs=[
                pl.BlockSpec((1, Cin, H * W), lambda b, i_ref: (b, 0, 0)),
                # Bank selection happens here: block index along the bank axis = prefetched idx.
                pl.BlockSpec((1, Cout, K), lambda b, i_ref: (i_ref[0], 0, 0)),
            ],
            out_specs=pl.BlockSpec((1, Cout, Ho * Wo), lambda b, i_ref: (b, 0, 0)),
            scratch_shapes=[pltpu.VMEM((Cin, Hp * Wp), jnp.float32)],
        ),
        compiler_params=pltpu.CompilerParams(
            dimension_semantics=("parallel",),
            vmem_limit_bytes=32 * 1024 * 1024,
        ),
    )(idx, x_flat, w_bank_prepped)

    return out_flat.reshape(B, Cout, Ho, Wo)        # free reshape back to NCHW


if __name__ == "__main__":
    # Small deterministic setup consistent with the module: a shared bank of N_CONVS
    # convolutions; this SubConv uses indices=1.
    B, C_IN, H, W = 2, 4, 16, 16
    C_OUT, KH, KW = 8, 3, 3
    N_CONVS = 3
    INDICES = 1

    key = jax.random.PRNGKey(0)
    k_x, k_w = jax.random.split(key)
    x = jax.random.normal(k_x, (B, C_IN, H, W), dtype=jnp.float32)
    weight_bank = 0.1 * jax.random.normal(
        k_w, (N_CONVS, C_OUT, C_IN, KH, KW), dtype=jnp.float32
    )

    # One-time bank layout (analogous to storing the shared nn.Parameter TPU-friendly at init).
    w_prepped = prepare_weight_bank(weight_bank)

    out = subconv_forward(x, w_prepped, INDICES, KH=KH, KW=KW, padding=1)
    out = jax.block_until_ready(out)

    # Reference check: same bf16-rounded operands, f32 conv (NCHW / OIHW).
    x_r = x.astype(jnp.bfloat16).astype(jnp.float32)
    w_r = weight_bank[INDICES].astype(jnp.bfloat16).astype(jnp.float32)
    ref = lax.conv_general_dilated(
        x_r, w_r, window_strides=(1, 1), padding=((1, 1), (1, 1)),
        dimension_numbers=("NCHW", "OIHW", "NCHW"),
    )
    assert out.shape == ref.shape
    assert jnp.allclose(out, ref, atol=2e-3, rtol=2e-3), float(jnp.max(jnp.abs(out - ref)))

    print("KERNEL_OK")
</pallas_src>

<mosaic_0001>
module attributes {stable_mosaic.version = 11 : i64} {
  func.func @_subconv_kernel(%arg0: i32, %arg1: memref<1xi32, #tpu.memory_space<smem>>, %arg2: memref<1x4x256xf32, #tpu.memory_space<vmem>>, %arg3: memref<1x8x36xbf16, #tpu.memory_space<vmem>>, %arg4: memref<1x8x256xf32, #tpu.memory_space<vmem>>, %arg5: memref<4x324xf32, #tpu.memory_space<vmem>>) attributes {dimension_semantics = [#tpu.dimension_semantics<parallel>], iteration_bounds = array<i64: 2>, scalar_prefetch = 1 : i64, scratch_operands = 1 : i64, tpu.core_type = #tpu.core_type<tc>, window_params = [{transform_indices = @transform_0, window_bounds = array<i64: 1, 4, 256>}, {transform_indices = @transform_1, window_bounds = array<i64: 1, 8, 36>}, {transform_indices = @transform_2, window_bounds = array<i64: 1, 8, 256>}]} {
    %cst = arith.constant 0.000000e+00 : f32
    %0 = vector.broadcast %cst : f32 to vector<4x324xf32>
    %c0 = arith.constant 0 : index
    %c0_0 = arith.constant 0 : index
    %1 = vector.load %arg5[%c0, %c0_0] : memref<4x324xf32, #tpu.memory_space<vmem>>, vector<4x324xf32>
    tpu.vector_store %arg5[%c0, %c0_0], %0 {strides = array<i32>} : memref<4x324xf32, #tpu.memory_space<vmem>>, vector<4x324xf32>,
    %c0_1 = arith.constant 0 : index
    %c0_2 = arith.constant 0 : index
    %c0_3 = arith.constant 0 : index
    %2 = vector.load %arg2[%c0_1, %c0_2, %c0_3] : memref<1x4x256xf32, #tpu.memory_space<vmem>>, vector<1x4x256xf32>
    %3 = vector.shape_cast %2 : vector<1x4x256xf32> to vector<4x256xf32>
    %4 = vector.extract_strided_slice %3 {offsets = [0, 0], sizes = [4, 16], strides = [1, 1]} : vector<4x256xf32> to vector<4x16xf32>
    %c0_4 = arith.constant 0 : index
    %c19 = arith.constant 19 : index
    %5 = vector.load %arg5[%c0_4, %c19] : memref<4x324xf32, #tpu.memory_space<vmem>>, vector<4x16xf32>
    tpu.vector_store %arg5[%c0_4, %c19], %4 {strides = array<i32>} : memref<4x324xf32, #tpu.memory_space<vmem>>, vector<4x16xf32>,
    %6 = vector.extract_strided_slice %3 {offsets = [0, 16], sizes = [4, 16], strides = [1, 1]} : vector<4x256xf32> to vector<4x16xf32>
    %c0_5 = arith.constant 0 : index
    %c37 = arith.constant 37 : index
    %7 = vector.load %arg5[%c0_5, %c37] : memref<4x324xf32, #tpu.memory_space<vmem>>, vector<4x16xf32>
    tpu.vector_store %arg5[%c0_5, %c37], %6 {strides = array<i32>} : memref<4x324xf32, #tpu.memory_space<vmem>>, vector<4x16xf32>,
    %8 = vector.extract_strided_slice %3 {offsets = [0, 32], sizes = [4, 16], strides = [1, 1]} : vector<4x256xf32> to vector<4x16xf32>
    %c0_6 = arith.constant 0 : index
    %c55 = arith.constant 55 : index
    %9 = vector.load %arg5[%c0_6, %c55] : memref<4x324xf32, #tpu.memory_space<vmem>>, vector<4x16xf32>
    tpu.vector_store %arg5[%c0_6, %c55], %8 {strides = array<i32>} : memref<4x324xf32, #tpu.memory_space<vmem>>, vector<4x16xf32>,
    %10 = vector.extract_strided_slice %3 {offsets = [0, 48], sizes = [4, 16], strides = [1, 1]} : vector<4x256xf32> to vector<4x16xf32>
    %c0_7 = arith.constant 0 : index
    %c73 = arith.constant 73 : index
    %11 = vector.load %arg5[%c0_7, %c73] : memref<4x324xf32, #tpu.memory_space<vmem>>, vector<4x16xf32>
    tpu.vector_store %arg5[%c0_7, %c73], %10 {strides = array<i32>} : memref<4x324xf32, #tpu.memory_space<vmem>>, vector<4x16xf32>,
    %12 = vector.extract_strided_slice %3 {offsets = [0, 64], sizes = [4, 16], strides = [1, 1]} : vector<4x256xf32> to vector<4x16xf32>
    %c0_8 = arith.constant 0 : index
    %c91 = arith.constant 91 : index
    %13 = vector.load %arg5[%c0_8, %c91] : memref<4x324xf32, #tpu.memory_space<vmem>>, vector<4x16xf32>
    tpu.vector_store %arg5[%c0_8, %c91], %12 {strides = array<i32>} : memref<4x324xf32, #tpu.memory_space<vmem>>, vector<4x16xf32>,
    %14 = vector.extract_strided_slice %3 {offsets = [0, 80], sizes = [4, 16], strides = [1, 1]} : vector<4x256xf32> to vector<4x16xf32>
    %c0_9 = arith.constant 0 : index
    %c109 = arith.constant 109 : index
    %15 = vector.load %arg5[%c0_9, %c109] : memref<4x324xf32, #tpu.memory_space<vmem>>, vector<4x16xf32>
    tpu.vector_store %arg5[%c0_9, %c109], %14 {strides = array<i32>} : memref<4x324xf32, #tpu.memory_space<vmem>>, vector<4x16xf32>,
    %16 = vector.extract_strided_slice %3 {offsets = [0, 96], sizes = [4, 16], strides = [1, 1]} : vector<4x256xf32> to vector<4x16xf32>
    %c0_10 = arith.constant 0 : index
    %c127 = arith.constant 127 : index
    %17 = vector.load %arg5[%c0_10, %c127] : memref<4x324xf32, #tpu.memory_space<vmem>>, vector<4x16xf32>
    tpu.vector_store %arg5[%c0_10, %c127], %16 {strides = array<i32>} : memref<4x324xf32, #tpu.memory_space<vmem>>, vector<4x16xf32>,
    %18 = vector.extract_strided_slice %3 {offsets = [0, 112], sizes = [4, 16], strides = [1, 1]} : vector<4x256xf32> to vector<4x16xf32>
    %c0_11 = arith.constant 0 : index
    %c145 = arith.constant 145 : index
    %19 = vector.load %arg5[%c0_11, %c145] : memref<4x324xf32, #tpu.memory_space<vmem>>, vector<4x16xf32>
    tpu.vector_store %arg5[%c0_11, %c145], %18 {strides = array<i32>} : memref<4x324xf32, #tpu.memory_space<vmem>>, vector<4x16xf32>,
    %20 = vector.extract_strided_slice %3 {offsets = [0, 128], sizes = [4, 16], strides = [1, 1]} : vector<4x256xf32> to vector<4x16xf32>
    %c0_12 = arith.constant 0 : index
    %c163 = arith.constant 163 : index
    %21 = vector.load %arg5[%c0_12, %c163] : memref<4x324xf32, #tpu.memory_space<vmem>>, vector<4x16xf32>
    tpu.vector_store %arg5[%c0_12, %c163], %20 {strides = array<i32>} : memref<4x324xf32, #tpu.memory_space<vmem>>, vector<4x16xf32>,
    %22 = vector.extract_strided_slice %3 {offsets = [0, 144], sizes = [4, 16], strides = [1, 1]} : vector<4x256xf32> to vector<4x16xf32>
    %c0_13 = arith.constant 0 : index
    %c181 = arith.constant 181 : index
    %23 = vector.load %arg5[%c0_13, %c181] : memref<4x324xf32, #tpu.memory_space<vmem>>, vector<4x16xf32>
    tpu.vector_store %arg5[%c0_13, %c181], %22 {strides = array<i32>} : memref<4x324xf32, #tpu.memory_space<vmem>>, vector<4x16xf32>,
    %24 = vector.extract_strided_slice %3 {offsets = [0, 160], sizes = [4, 16], strides = [1, 1]} : vector<4x256xf32> to vector<4x16xf32>
    %c0_14 = arith.constant 0 : index
    %c199 = arith.constant 199 : index
    %25 = vector.load %arg5[%c0_14, %c199] : memref<4x324xf32, #tpu.memory_space<vmem>>, vector<4x16xf32>
    tpu.vector_store %arg5[%c0_14, %c199], %24 {strides = array<i32>} : memref<4x324xf32, #tpu.memory_space<vmem>>, vector<4x16xf32>,
    %26 = vector.extract_strided_slice %3 {offsets = [0, 176], sizes = [4, 16], strides = [1, 1]} : vector<4x256xf32> to vector<4x16xf32>
    %c0_15 = arith.constant 0 : index
    %c217 = arith.constant 217 : index
    %27 = vector.load %arg5[%c0_15, %c217] : memref<4x324xf32, #tpu.memory_space<vmem>>, vector<4x16xf32>
    tpu.vector_store %arg5[%c0_15, %c217], %26 {strides = array<i32>} : memref<4x324xf32, #tpu.memory_space<vmem>>, vector<4x16xf32>,
    %28 = vector.extract_strided_slice %3 {offsets = [0, 192], sizes = [4, 16], strides = [1, 1]} : vector<4x256xf32> to vector<4x16xf32>
    %c0_16 = arith.constant 0 : index
    %c235 = arith.constant 235 : index
    %29 = vector.load %arg5[%c0_16, %c235] : memref<4x324xf32, #tpu.memory_space<vmem>>, vector<4x16xf32>
    tpu.vector_store %arg5[%c0_16, %c235], %28 {strides = array<i32>} : memref<4x324xf32, #tpu.memory_space<vmem>>, vector<4x16xf32>,
    %30 = vector.extract_strided_slice %3 {offsets = [0, 208], sizes = [4, 16], strides = [1, 1]} : vector<4x256xf32> to vector<4x16xf32>
    %c0_17 = arith.constant 0 : index
    %c253 = arith.constant 253 : index
    %31 = vector.load %arg5[%c0_17, %c253] : memref<4x324xf32, #tpu.memory_space<vmem>>, vector<4x16xf32>
    tpu.vector_store %arg5[%c0_17, %c253], %30 {strides = array<i32>} : memref<4x324xf32, #tpu.memory_space<vmem>>, vector<4x16xf32>,
    %32 = vector.extract_strided_slice %3 {offsets = [0, 224], sizes = [4, 16], strides = [1, 1]} : vector<4x256xf32> to vector<4x16xf32>
    %c0_18 = arith.constant 0 : index
    %c271 = arith.constant 271 : index
    %33 = vector.load %arg5[%c0_18, %c271] : memref<4x324xf32, #tpu.memory_space<vmem>>, vector<4x16xf32>
    tpu.vector_store %arg5[%c0_18, %c271], %32 {strides = array<i32>} : memref<4x324xf32, #tpu.memory_space<vmem>>, vector<4x16xf32>,
    %34 = vector.extract_strided_slice %3 {offsets = [0, 240], sizes = [4, 16], strides = [1, 1]} : vector<4x256xf32> to vector<4x16xf32>
    %c0_19 = arith.constant 0 : index
    %c289 = arith.constant 289 : index
    %35 = vector.load %arg5[%c0_19, %c289] : memref<4x324xf32, #tpu.memory_space<vmem>>, vector<4x16xf32>
    tpu.vector_store %arg5[%c0_19, %c289], %34 {strides = array<i32>} : memref<4x324xf32, #tpu.memory_space<vmem>>, vector<4x16xf32>,
    %c0_20 = arith.constant 0 : index
    %c0_21 = arith.constant 0 : index
    %36 = vector.load %arg5[%c0_20, %c0_21] : memref<4x324xf32, #tpu.memory_space<vmem>>, vector<4x324xf32>
    %37 = arith.truncf %36 : vector<4x324xf32> to vector<4x324xbf16>
    %38 = vector.extract_strided_slice %37 {offsets = [0, 0], sizes = [4, 286], strides = [1, 1]} : vector<4x324xbf16> to vector<4x286xbf16>
    %39 = vector.extract_strided_slice %37 {offsets = [0, 1], sizes = [4, 286], strides = [1, 1]} : vector<4x324xbf16> to vector<4x286xbf16>
    %40 = vector.extract_strided_slice %37 {offsets = [0, 2], sizes = [4, 286], strides = [1, 1]} : vector<4x324xbf16> to vector<4x286xbf16>
    %41 = vector.extract_strided_slice %37 {offsets = [0, 18], sizes = [4, 286], strides = [1, 1]} : vector<4x324xbf16> to vector<4x286xbf16>
    %42 = vector.extract_strided_slice %37 {offsets = [0, 19], sizes = [4, 286], strides = [1, 1]} : vector<4x324xbf16> to vector<4x286xbf16>
    %43 = vector.extract_strided_slice %37 {offsets = [0, 20], sizes = [4, 286], strides = [1, 1]} : vector<4x324xbf16> to vector<4x286xbf16>
    %44 = vector.extract_strided_slice %37 {offsets = [0, 36], sizes = [4, 286], strides = [1, 1]} : vector<4x324xbf16> to vector<4x286xbf16>
    %45 = vector.extract_strided_slice %37 {offsets = [0, 37], sizes = [4, 286], strides = [1, 1]} : vector<4x324xbf16> to vector<4x286xbf16>
    %46 = vector.extract_strided_slice %37 {offsets = [0, 38], sizes = [4, 286], strides = [1, 1]} : vector<4x324xbf16> to vector<4x286xbf16>
    %47 = tpu.concatenate %38, %39, %40, %41, %42, %43, %44, %45, %46 in 0 : vector<4x286xbf16>, vector<4x286xbf16>, vector<4x286xbf16>, vector<4x286xbf16>, vector<4x286xbf16>, vector<4x286xbf16>, vector<4x286xbf16>, vector<4x286xbf16>, vector<4x286xbf16> -> vector<36x286xbf16>
    %c0_22 = arith.constant 0 : index
    %c0_23 = arith.constant 0 : index
    %c0_24 = arith.constant 0 : index
    %48 = vector.load %arg3[%c0_22, %c0_23, %c0_24] : memref<1x8x36xbf16, #tpu.memory_space<vmem>>, vector<1x8x36xbf16>
    %49 = vector.shape_cast %48 : vector<1x8x36xbf16> to vector<8x36xbf16>
    %cst_25 = arith.constant dense<0.000000e+00> : vector<8x286xf32>
    %50 = tpu.matmul %49, %47, %cst_25 {dimension_numbers = #tpu.dot_dimension_numbers<[1], [0], [0], [1], [0, 0, 1, 1], [], []>} : vector<8x36xbf16>, vector<36x286xbf16>, vector<8x286xf32> -> vector<8x286xf32>
    %51 = vector.extract_strided_slice %50 {offsets = [0, 0], sizes = [8, 16], strides = [1, 1]} : vector<8x286xf32> to vector<8x16xf32>
    %52 = vector.extract_strided_slice %50 {offsets = [0, 18], sizes = [8, 16], strides = [1, 1]} : vector<8x286xf32> to vector<8x16xf32>
    %53 = vector.extract_strided_slice %50 {offsets = [0, 36], sizes = [8, 16], strides = [1, 1]} : vector<8x286xf32> to vector<8x16xf32>
    %54 = vector.extract_strided_slice %50 {offsets = [0, 54], sizes = [8, 16], strides = [1, 1]} : vector<8x286xf32> to vector<8x16xf32>
    %55 = vector.extract_strided_slice %50 {offsets = [0, 72], sizes = [8, 16], strides = [1, 1]} : vector<8x286xf32> to vector<8x16xf32>
    %56 = vector.extract_strided_slice %50 {offsets = [0, 90], sizes = [8, 16], strides = [1, 1]} : vector<8x286xf32> to vector<8x16xf32>
    %57 = vector.extract_strided_slice %50 {offsets = [0, 108], sizes = [8, 16], strides = [1, 1]} : vector<8x286xf32> to vector<8x16xf32>
    %58 = vector.extract_strided_slice %50 {offsets = [0, 126], sizes = [8, 16], strides = [1, 1]} : vector<8x286xf32> to vector<8x16xf32>
    %59 = vector.extract_strided_slice %50 {offsets = [0, 144], sizes = [8, 16], strides = [1, 1]} : vector<8x286xf32> to vector<8x16xf32>
    %60 = vector.extract_strided_slice %50 {offsets = [0, 162], sizes = [8, 16], strides = [1, 1]} : vector<8x286xf32> to vector<8x16xf32>
    %61 = vector.extract_strided_slice %50 {offsets = [0, 180], sizes = [8, 16], strides = [1, 1]} : vector<8x286xf32> to vector<8x16xf32>
    %62 = vector.extract_strided_slice %50 {offsets = [0, 198], sizes = [8, 16], strides = [1, 1]} : vector<8x286xf32> to vector<8x16xf32>
    %63 = vector.extract_strided_slice %50 {offsets = [0, 216], sizes = [8, 16], strides = [1, 1]} : vector<8x286xf32> to vector<8x16xf32>
    %64 = vector.extract_strided_slice %50 {offsets = [0, 234], sizes = [8, 16], strides = [1, 1]} : vector<8x286xf32> to vector<8x16xf32>
    %65 = vector.extract_strided_slice %50 {offsets = [0, 252], sizes = [8, 16], strides = [1, 1]} : vector<8x286xf32> to vector<8x16xf32>
    %66 = vector.extract_strided_slice %50 {offsets = [0, 270], sizes = [8, 16], strides = [1, 1]} : vector<8x286xf32> to vector<8x16xf32>
    %67 = tpu.concatenate %51, %52, %53, %54, %55, %56, %57, %58, %59, %60, %61, %62, %63, %64, %65, %66 in 1 : vector<8x16xf32>, vector<8x16xf32>, vector<8x16xf32>, vector<8x16xf32>, vector<8x16xf32>, vector<8x16xf32>, vector<8x16xf32>, vector<8x16xf32>, vector<8x16xf32>, vector<8x16xf32>, vector<8x16xf32>, vector<8x16xf32>, vector<8x16xf32>, vector<8x16xf32>, vector<8x16xf32>, vector<8x16xf32> -> vector<8x256xf32>
    %c0_26 = arith.constant 0 : index
    %c0_27 = arith.constant 0 : index
    %c0_28 = arith.constant 0 : index
    %68 = vector.load %arg4[%c0_26, %c0_27, %c0_28] : memref<1x8x256xf32, #tpu.memory_space<vmem>>, vector<1x8x256xf32>
    %69 = vector.shape_cast %68 : vector<1x8x256xf32> to vector<8x256xf32>
    %70 = vector.shape_cast %67 : vector<8x256xf32> to vector<1x8x256xf32>
    tpu.vector_store %arg4[%c0_26, %c0_27, %c0_28], %70 {strides = array<i32>} : memref<1x8x256xf32, #tpu.memory_space<vmem>>, vector<1x8x256xf32>,
    return
  }
  func.func @transform_0(%arg0: i32, %arg1: memref<1xi32, #tpu.memory_space<smem>>) -> (i32, i32, i32) {
    %c0_i32 = arith.constant 0 : i32
    %c0_i32_0 = arith.constant 0 : i32
    %c0_i32_1 = arith.constant 0 : i32
    return %arg0, %c0_i32, %c0_i32_0 : i32, i32, i32
  }
  func.func @transform_1(%arg0: i32, %arg1: memref<1xi32, #tpu.memory_space<smem>>) -> (i32, i32, i32) {
    %c0 = arith.constant 0 : index
    %0 = memref.load %arg1[%c0] : memref<1xi32, #tpu.memory_space<smem>>
    %c0_i32 = arith.constant 0 : i32
    %c0_i32_0 = arith.constant 0 : i32
    %c0_i32_1 = arith.constant 0 : i32
    return %0, %c0_i32, %c0_i32_0 : i32, i32, i32
  }
  func.func @transform_2(%arg0: i32, %arg1: memref<1xi32, #tpu.memory_space<smem>>) -> (i32, i32, i32) {
    %c0_i32 = arith.constant 0 : i32
    %c0_i32_0 = arith.constant 0 : i32
    %c0_i32_1 = arith.constant 0 : i32
    return %arg0, %c0_i32, %c0_i32_0 : i32, i32, i32
  }
}

</mosaic_0001>

<llo_original>
// kernel: tpu_custom_call.1
$region0: #{tpu_custom_call.1}
  #allocation0 [shape = 'u32[]', space=smem, size = 0x4, offset = 0x4, fixed_abs, tag = 'smem constant byte address 0x4 - core index']
  #allocation1 [shape = 'u32[144,128]{1,0:T(1,128)}', space=vmem, size = 0x12000, scoped, tag = 'internal scratch']
  #allocation2 [shape = 'f32[4,324]{1,0:T(4,128)}', space=vmem, size = 0x1800, scoped, tag = 'scratch operand']
  #allocation3 [shape = 's32[1]{0}', space=sflag, size = 0x4, scoped, tag = 'scoped memory for tpu_custom_call.1']
  #allocation4 [shape = 's32[1]{0:T(128)S(6)}', space=smem, size = 0x200, scoped, tag = 'prefetched SMEM operand 0']
  %s0 = inlined_call_operand.<no memory space> [shape: s32[1], index: 0, kind: input, shape index: {}]
  %s1 = inlined_call_operand.hbm [shape: f32[2,4,256], index: 1, kind: input, shape index: {}]
  %s2 = inlined_call_operand.hbm [shape: bf16[3,8,36], index: 2, kind: input, shape index: {}]
  %s3 = inlined_call_operand.hbm [shape: f32[2,8,256], index: 3, kind: output, shape index: {}]
  %s4 = sld [smem:[#allocation0]]
  $region49: #{tpu_custom_call.1} parent=0
    _
  %s6 = ssub.s32 1, %s4
  %s7 = scalar_select 0, %s6, %s4
  %8 = sst [smem:[#allocation4]] %s0
  $region1: #{tpu_custom_call.1} parent=0
    #allocation5 [shape = 'u8[8192]{0}', space=vmem, size = 0x2000, scoped, tag = 'input window, operand 1']
    #allocation6 [shape = 's32[2]{0}', space=sflag, size = 0x8, scoped, tag = 'scoped memory for tpu_custom_call.1']
    #allocation7 [shape = 's32[2]{0}', space=sflag, size = 0x8, scoped, tag = 'scoped memory for tpu_custom_call.1']
    #allocation8 [shape = 'u8[2048]{0}', space=vmem, size = 0x800, scoped, tag = 'input window, operand 2, single buffered']
    #allocation9 [shape = 's32[1]{0}', space=sflag, size = 0x4, scoped, tag = 'scoped memory for tpu_custom_call.1']
    #allocation10 [shape = 'u8[16384]{0}', space=vmem, size = 0x4000, scoped, tag = 'output window, operand 0']
    %9 = vsyncpa [#allocation6], 0
    %s10 = scalar_lea.sflag [#allocation6], 1
    %11 = vsyncpa %s10, 0
    %12 = vsyncpa [#allocation9], 0
    %13 = vsyncpa [#allocation7], 0
    %s14 = scalar_lea.sflag [#allocation7], 1
    %15 = vsyncpa %s14, 0
    loop: start=0, step=1, limit=4
    $region2: #{tpu_custom_call.1} parent=1 // loop_pre_header
      _
    $region3: #{tpu_custom_call.1} parent=1 // loop_header
      %s17 = sphi 0, %s21
      %p18 = scmp.ge.s32.totalorder %s17, 4
      %s27 = sphi 0, %s29
      %s30 = sphi 0, %s27
      %s31 = sphi 0, %s30
      %s47 = sphi 0, %s31
      %s55 = sphi 0, %s57
      %s58 = sphi 0, %s55
      %s59 = sphi 0, %s58
      %s75 = sphi 0, %s59
      %s81 = sphi 0, %s83
      %s84 = sphi 0, %s81
      %s85 = sphi 0, %s84
      %s101 = sphi 0, %s85
    $region4: #{tpu_custom_call.1} parent=1 // loop_header_branch
      %20 = sbr.rel (%p18) target = $region8
    $region5: #{tpu_custom_call.1} parent=1 // loop_body
      %s22 = ssub.s32 %s17, 1
      %s23 = ssub.s32 %s17, 2
      %s24 = sadd.s32 %s17, 1
      %s25 = ssub.s32 %s17, %s24
      %p26 = scmp.eq.s32.totalorder %s25, 0
      %s28 = sadd.s32 %s27, 1
      %s29 = scalar_select %p26, %s27, %s28
      %p32 = pneg %p26
      %p33 = scmp.eq.s32.totalorder %s17, 1
      %p34 = por %p32, %p33
      %p35 = scmp.ne.s32.totalorder %s27, %s30
      %p36 = scmp.eq.s32.totalorder %s17, 0
      %p37 = por %p35, %p36
      %p38 = scmp.ne.s32.totalorder %s27, %s30
      %p39 = scmp.eq.s32.totalorder %s22, 1
      %p40 = por %p38, %p39
      %p41 = scmp.ne.s32.totalorder %s30, %s31
      %p42 = scmp.eq.s32.totalorder %s22, 0
      %p43 = por %p41, %p42
      %p44 = scmp.ne.s32.totalorder %s30, %s31
      %p45 = scmp.eq.s32.totalorder %s23, 1
      %p46 = por %p44, %p45
      %p48 = scmp.ne.s32.totalorder %s31, %s47
      %p49 = scmp.eq.s32.totalorder %s23, 0
      %p50 = por %p48, %p49
      %s51 = sld [smem:[#allocation4]]
      %s52 = sld [smem:[#allocation4]]
      %s53 = ssub.s32 %s51, %s52
      %p54 = scmp.eq.s32.totalorder %s53, 0
      %s56 = sadd.s32 %s55, 1
      %s57 = scalar_select %p54, %s55, %s56
      %p60 = pneg %p54
      %p61 = scmp.eq.s32.totalorder %s17, 1
      %p62 = por %p60, %p61
      %p63 = scmp.ne.s32.totalorder %s55, %s58
      %p64 = scmp.eq.s32.totalorder %s17, 0
      %p65 = por %p63, %p64
      %p66 = scmp.ne.s32.totalorder %s55, %s58
      %p67 = scmp.eq.s32.totalorder %s22, 1
      %p68 = por %p66, %p67
      %p69 = scmp.ne.s32.totalorder %s58, %s59
      %p70 = scmp.eq.s32.totalorder %s22, 0
      %p71 = por %p69, %p70
      %p72 = scmp.ne.s32.totalorder %s58, %s59
      %p73 = scmp.eq.s32.totalorder %s23, 1
      %p74 = por %p72, %p73
      %p76 = scmp.ne.s32.totalorder %s59, %s75
      %p77 = scmp.eq.s32.totalorder %s23, 0
      %p78 = por %p76, %p77
      %s79 = ssub.s32 %s17, %s24
      %p80 = scmp.eq.s32.totalorder %s79, 0
      %s82 = sadd.s32 %s81, 1
      %s83 = scalar_select %p80, %s81, %s82
      %p86 = pneg %p80
      %p87 = scmp.eq.s32.totalorder %s17, 1
      %p88 = por %p86, %p87
      %p89 = scmp.ne.s32.totalorder %s81, %s84
      %p90 = scmp.eq.s32.totalorder %s17, 0
      %p91 = por %p89, %p90
      %p92 = scmp.ne.s32.totalorder %s81, %s84
      %p93 = scmp.eq.s32.totalorder %s22, 1
      %p94 = por %p92, %p93
      %p95 = scmp.ne.s32.totalorder %s84, %s85
      %p96 = scmp.eq.s32.totalorder %s22, 0
      %p97 = por %p95, %p96
      %p98 = scmp.ne.s32.totalorder %s84, %s85
      %p99 = scmp.eq.s32.totalorder %s23, 1
      %p100 = por %p98, %p99
      %p102 = scmp.ne.s32.totalorder %s85, %s101
      %p103 = scmp.eq.s32.totalorder %s23, 0
      %p104 = por %p102, %p103
      %p105 = scmp.le.s32.totalorder 1, %s17
      %p106 = scmp.lt.s32.totalorder %s17, 3
      %p107 = pnand %p105, %p106
      %p108 = pneg %p107
      // Predicated region
      $region9: #{tpu_custom_call.1} parent=5 // pred_check
        _
      $region10: #{tpu_custom_call.1} parent=5 // pred_check_branch
        %110 = sbr.rel (%p107) target = $region12
      $region11: #{tpu_custom_call.1} parent=5 // pred_region
        %s111 = ssub.s32 %s17, 1
        // Predicated region
        $region13: #{tpu_custom_call.1} parent=11 // pred_check
          %p112 = pneg %p71
        $region14: #{tpu_custom_call.1} parent=11 // pred_check_branch
          %114 = sbr.rel (%p112) target = $region16
        $region15: #{tpu_custom_call.1} parent=11 // pred_region
          %s115 = sld [smem:[#allocation4]]
          %s117 = ssub.s32 64, 64
          %118 = vsyncadd [#allocation9], %s117
          %s119 = smul.addr %s115, 64
          %s120 = scalar_lea.hbm %s2, %s119
          %s122 = sshll.u32 [#allocation8], 4
          %s123 = int_to_ptr.vmem [resolvable:$true] %s122
          %125 = dma.hbm_to_vmem [thread:$0]  %s120, 64, %s123, [#allocation9]
        $region16: #{tpu_custom_call.1} parent=11 // pred_fallthru
          _
      $region12: #{tpu_custom_call.1} parent=5 // pred_fallthru
        _
      %p126 = scmp.lt.s32.totalorder %s17, 2
      // Predicated region
      $region17: #{tpu_custom_call.1} parent=5 // pred_check
        %p127 = pneg %p126
      $region18: #{tpu_custom_call.1} parent=5 // pred_check_branch
        %129 = sbr.rel (%p127) target = $region20
      $region19: #{tpu_custom_call.1} parent=5 // pred_region
        // Predicated region
        $region21: #{tpu_custom_call.1} parent=19 // pred_check
          %p130 = pneg %p37
        $region22: #{tpu_custom_call.1} parent=19 // pred_check_branch
          %132 = sbr.rel (%p130) target = $region24
        $region23: #{tpu_custom_call.1} parent=19 // pred_region
          %s133 = sand.u32 %s27, 1
          %s134 = scalar_lea.sflag [#allocation6], %s133
          %s135 = sand.u32 %s27, 1
          %s136 = smul.addr %s135, 8
          %s137 = scalar_lea.vmem [#allocation5], %s136
          %s139 = ssub.s32 128, 128
          %140 = vsyncadd %s134, %s139
          %s141 = smul.addr %s17, 2
          %s142 = smul.addr %s141, 64
          %s143 = scalar_lea.hbm %s1, %s142
          %s145 = sshll.u32 %s137, 4
          %s146 = int_to_ptr.vmem [resolvable:$true] %s145
          %148 = dma.hbm_to_vmem [thread:$0]  %s143, 128, %s146, %s134
        $region24: #{tpu_custom_call.1} parent=19 // pred_fallthru
          _
      $region20: #{tpu_custom_call.1} parent=5 // pred_fallthru
        _
      %p149 = scmp.le.s32.totalorder 1, %s17
      %p150 = scmp.lt.s32.totalorder %s17, 3
      %p151 = pnand %p149, %p150
      %p152 = pneg %p151
      // Predicated region
      $region25: #{tpu_custom_call.1} parent=5 // pred_check
        _
      $region26: #{tpu_custom_call.1} parent=5 // pred_check_branch
        %154 = sbr.rel (%p151) target = $region28
      $region27: #{tpu_custom_call.1} parent=5 // pred_region
        %s155 = ssub.s32 %s17, 1
        %s156 = sand.u32 %s30, 1
        %s157 = scalar_lea.sflag [#allocation6], %s156
        %s158 = sand.u32 %s30, 1
        %s159 = smul.addr %s158, 8
        %s160 = scalar_lea.vmem [#allocation5], %s159
        // Predicated region
        $region29: #{tpu_custom_call.1} parent=27 // pred_check
          %p161 = pneg %p43
        $region30: #{tpu_custom_call.1} parent=27 // pred_check_branch
          %163 = sbr.rel (%p161) target = $region32
        $region31: #{tpu_custom_call.1} parent=27 // pred_region
          %164 = dma.done %s157, 128
        $region32: #{tpu_custom_call.1} parent=27 // pred_fallthru
          _
        // Predicated region
        $region33: #{tpu_custom_call.1} parent=27 // pred_check
          %p165 = pneg %p71
        $region34: #{tpu_custom_call.1} parent=27 // pred_check_branch
          %167 = sbr.rel (%p165) target = $region36
        $region35: #{tpu_custom_call.1} parent=27 // pred_region
          %168 = dma.done [#allocation9], 64
        $region36: #{tpu_custom_call.1} parent=27 // pred_fallthru
          _
        %s169 = sand.u32 %s30, 1
        %s170 = scalar_lea.sflag [#allocation6], %s169
        %s171 = sand.u32 %s30, 1
        %s172 = smul.addr %s171, 8
        %s173 = scalar_lea.vmem [#allocation5], %s172
        %p174 = pneg %p43
        %p175 = pneg %p40
        %p176 = pneg %p71
        %p177 = pneg %p68
        %p178 = pneg %p97
        %p179 = pneg %p94
        %s180 = sand.u32 %s84, 1
        %s181 = scalar_lea.sflag [#allocation7], %s180
        %s182 = sand.u32 %s84, 1
        %s183 = smul.addr %s182, 16
        %s184 = scalar_lea.vmem [#allocation10], %s183
        %s185 = sld [smem:[#allocation4]]
        %187 = vst [vmem:[#allocation2] sm:$0xff] 0.0
        %vm188 = vcmask 551936
        %189 = vst.msk [vmem:[#allocation2 + $0x8] sm:$0xf] %vm188, 0.0
        %v190 = vld [vmem:[%s160] sm:$0xff]
        %192 = vrot.lane.b32.xlu0 %v190, 19
        %v193 = vpop.permute.xlu0 %192
        %vm195 = vcmask 281752
        %196 = vst.msk [vmem:[#allocation2] sm:$0xf] %vm195, %v193
        %197 = vrot.lane.b32.xlu0 %v190, 21
        %v198 = vpop.permute.xlu0 %197
        %vm200 = vcmask 429352
        %201 = vst.msk [vmem:[#allocation2] sm:$0xf] %vm200, %v198
        %202 = vrot.lane.b32.xlu0 %v190, 23
        %v203 = vpop.permute.xlu0 %202
        %vm205 = vcmask 576952
        %206 = vst.msk [vmem:[#allocation2] sm:$0xf] %vm205, %v203
        %207 = vrot.lane.b32.xlu0 %v190, 25
        %v208 = vpop.permute.xlu0 %207
        %vm210 = vcmask 724552
        %211 = vst.msk [vmem:[#allocation2] sm:$0xf] %vm210, %v208
        %212 = vrot.lane.b32.xlu0 %v190, 27
        %v213 = vpop.permute.xlu0 %212
        %vm215 = vcmask 872152
        %216 = vst.msk [vmem:[#allocation2] sm:$0xf] %vm215, %v213
        %217 = vrot.lane.b32.xlu0 %v190, 29
        %v218 = vpop.permute.xlu0 %217
        %vm220 = vcmask 1019752
        %221 = vst.msk [vmem:[#allocation2] sm:$0xf] %vm220, %v218
        %222 = vrot.lane.b32.xlu0 %v190, 31
        %v223 = vpop.permute.xlu0 %222
        %v224 = vrot.slane %v223, 4
        %vm225 = vcmask 252928
        %v226 = vsel %vm225, %v224, %v223
        %vm228 = vcmask 1044472
        %vm229 = vcmask 121860
        %vm230 = vmor %vm229, %vm228
        %231 = vst.msk [vmem:[#allocation2] sm:$0xff] %vm230, %v226
        %232 = vrot.lane.b32.xlu0 %v190, 33
        %v233 = vpop.permute.xlu0 %232
        %vm235 = vcmask 265352
        %236 = vst.msk [vmem:[#allocation2 + $0x4] sm:$0xf] %vm235, %v233
        %237 = vrot.lane.b32.xlu0 %v190, 35
        %v238 = vpop.permute.xlu0 %237
        %v239 = vrot.slane %v238, 4
        %vm240 = vcmask 285696
        %v241 = vsel %vm240, %v238, %v239
        %vm243 = vcmask 412952
        %244 = vst.msk [vmem:[#allocation2 + $0x4] sm:$0xf] %vm243, %v241
        %245 = vrot.lane.b32.xlu0 %v190, 37
        %v246 = vpop.permute.xlu0 %245
        %v247 = vrot.slane %v246, 4
        %vm248 = vcmask 302080
        %v249 = vsel %vm248, %v246, %v247
        %vm251 = vcmask 560552
        %252 = vst.msk [vmem:[#allocation2 + $0x4] sm:$0xf] %vm251, %v249
        %253 = vrot.lane.b32.xlu0 %v190, 39
        %v254 = vpop.permute.xlu0 %253
        %v255 = vrot.slane %v254, 4
        %vm256 = vcmask 318464
        %v257 = vsel %vm256, %v254, %v255
        %vm259 = vcmask 708152
        %260 = vst.msk [vmem:[#allocation2 + $0x4] sm:$0xf] %vm259, %v257
        %261 = vrot.lane.b32.xlu0 %v190, 41
        %v262 = vpop.permute.xlu0 %261
        %v263 = vrot.slane %v262, 4
        %vm264 = vcmask 334848
        %v265 = vsel %vm264, %v262, %v263
        %vm267 = vcmask 855752
        %268 = vst.msk [vmem:[#allocation2 + $0x4] sm:$0xf] %vm267, %v265
        %269 = vrot.lane.b32.xlu0 %v190, 43
        %v270 = vpop.permute.xlu0 %269
        %v271 = vrot.slane %v270, 4
        %vm272 = vcmask 351232
        %v273 = vsel %vm272, %v270, %v271
        %vm275 = vcmask 1003352
        %276 = vst.msk [vmem:[#allocation2 + $0x4] sm:$0xf] %vm275, %v273
        %277 = vrot.lane.b32.xlu0 %v190, 45
        %v278 = vpop.permute.xlu0 %277
        %v279 = vrot.slane %v278, 4
        %vm280 = vcmask 367616
        %v281 = vsel %vm280, %v278, %v279
        %vm283 = vcmask 1044456
        %vm284 = vcmask 105476
        %vm285 = vmor %vm284, %vm283
        %286 = vst.msk [vmem:[#allocation2 + $0x4] sm:$0xff] %vm285, %v281
        %287 = vrot.lane.b32.xlu0 %v190, 47
        %v288 = vpop.permute.xlu0 %287
        %v289 = vrot.slane %v288, 4
        %vm291 = vcmask 248952
        %292 = vst.msk [vmem:[#allocation2 + $0x8] sm:$0xf] %vm291, %v289
        %293 = vrot.lane.b32.xlu0 %v190, 49
        %v294 = vpop.permute.xlu0 %293
        %v295 = vrot.slane %v294, 4
        %vm297 = vcmask 396552
        %298 = vst.msk [vmem:[#allocation2 + $0x8] sm:$0xf] %vm297, %v295
        %v299 = vld [vmem:[#allocation2] sm:$0xff]
        %v300 = vld [vmem:[#allocation2 + $0x8] sm:$0xf]
        %v302 = vcombine.high %v299, %v299
        %v304 = vpack.c.bf16 %v299, %v299
        %v305 = vpack.c.bf16 %v302, %v302
        %v306 = vpack.c.bf16 %v300, %v300
        %v310 = vrot.slane %v304, 6
        %v311 = vrot.slane %v305, 6
        %v312 = vrot.slane %v306, 6
        %313 = vrot.lane.b32.xlu0 %v310, 127
        %v314 = vpop.permute.xlu0 %313
        %315 = vrot.lane.b32.xlu0 %v311, 127
        %v316 = vpop.permute.xlu0 %315
        %317 = vrot.lane.b32.xlu0 %v312, 127
        %v318 = vpop.permute.xlu0 %317
        %vm319 = vcmask 1039360
        %v320 = vsel %vm319, %v314, %v316
        %v321 = vsel %vm319, %v316, %v318
        %v322 = vrot.slane %v304, 4
        %v323 = vrot.slane %v305, 4
        %v324 = vrot.slane %v306, 4
        %325 = vrot.lane.b32.xlu0 %v322, 126
        %v326 = vpop.permute.xlu0 %325
        %327 = vrot.lane.b32.xlu0 %v323, 126
        %v328 = vpop.permute.xlu0 %327
        %329 = vrot.lane.b32.xlu0 %v324, 126
        %v330 = vpop.permute.xlu0 %329
        %vm331 = vcmask 1031168
        %v332 = vsel %vm331, %v326, %v328
        %v333 = vsel %vm331, %v328, %v330
        %v334 = vrot.slane %v304, 2
        %v335 = vrot.slane %v305, 2
        %v336 = vrot.slane %v306, 2
        %337 = vrot.lane.b32.xlu0 %v334, 110
        %v338 = vpop.permute.xlu0 %337
        %339 = vrot.lane.b32.xlu0 %v335, 110
        %v340 = vpop.permute.xlu0 %339
        %341 = vrot.lane.b32.xlu0 %v336, 110
        %v342 = vpop.permute.xlu0 %341
        %vm343 = vcmask 900096
        %v344 = vsel %vm343, %v338, %v340
        %v345 = vsel %vm343, %v340, %v342
        %346 = vrot.lane.b32.xlu0 %v304, 109
        %v347 = vpop.permute.xlu0 %346
        %348 = vrot.lane.b32.xlu0 %v305, 109
        %v349 = vpop.permute.xlu0 %348
        %350 = vrot.lane.b32.xlu0 %v306, 109
        %v351 = vpop.permute.xlu0 %350
        %vm352 = vcmask 891904
        %v353 = vsel %vm352, %v347, %v349
        %v354 = vsel %vm352, %v349, %v351
        %355 = vrot.lane.b32.xlu0 %v310, 108
        %v356 = vpop.permute.xlu0 %355
        %357 = vrot.lane.b32.xlu0 %v311, 108
        %v358 = vpop.permute.xlu0 %357
        %359 = vrot.lane.b32.xlu0 %v312, 108
        %v360 = vpop.permute.xlu0 %359
        %vm361 = vcmask 883712
        %v362 = vsel %vm361, %v356, %v358
        %v363 = vsel %vm361, %v358, %v360
        %364 = vrot.lane.b32.xlu0 %v322, 92
        %v365 = vpop.permute.xlu0 %364
        %366 = vrot.lane.b32.xlu0 %v323, 92
        %v367 = vpop.permute.xlu0 %366
        %368 = vrot.lane.b32.xlu0 %v324, 92
        %v369 = vpop.permute.xlu0 %368
        %vm370 = vcmask 752640
        %v371 = vsel %vm370, %v365, %v367
        %v372 = vsel %vm370, %v367, %v369
        %373 = vrot.lane.b32.xlu0 %v334, 91
        %v374 = vpop.permute.xlu0 %373
        %375 = vrot.lane.b32.xlu0 %v335, 91
        %v376 = vpop.permute.xlu0 %375
        %377 = vrot.lane.b32.xlu0 %v336, 91
        %v378 = vpop.permute.xlu0 %377
        %vm379 = vcmask 744448
        %v380 = vsel %vm379, %v374, %v376
        %v381 = vsel %vm379, %v376, %v378
        %382 = vrot.lane.b32.xlu0 %v304, 90
        %v383 = vpop.permute.xlu0 %382
        %384 = vrot.lane.b32.xlu0 %v305, 90
        %v385 = vpop.permute.xlu0 %384
        %386 = vrot.lane.b32.xlu0 %v306, 90
        %v387 = vpop.permute.xlu0 %386
        %vm388 = vcmask 736256
        %v389 = vsel %vm388, %v383, %v385
        %v390 = vsel %vm388, %v385, %v387
        %vm391 = vcmask 1041408
        %v394 = vsel %vm391, %v304, %v320
        %v397 = vsel %vm391, %v305, %v321
        %v400 = vsel %vm391, %v306, %v318
        %vm401 = vcmask 1043456
        %v403 = vsel %vm401, %v394, %v332
        %v405 = vsel %vm401, %v397, %v333
        %v407 = vsel %vm401, %v400, %v330
        %vm408 = vcmask 1045504
        %v410 = vsel %vm408, %v403, %v344
        %v413 = vsel %vm408, %v405, %v345
        %v416 = vsel %vm408, %v407, %v342
        %v420 = vsel %vm391, %v353, %v362
        %v423 = vsel %vm391, %v354, %v363
        %v426 = vsel %vm391, %v351, %v360
        %v428 = vsel %vm401, %v420, %v371
        %v430 = vsel %vm401, %v423, %v372
        %v432 = vsel %vm401, %v426, %v369
        %v434 = vsel %vm408, %v428, %v380
        %v437 = vsel %vm408, %v430, %v381
        %v440 = vsel %vm408, %v432, %v378
        %v442 = vld [vmem:[#allocation8] sm:$0xf]
        %vm443 = vcmask 293888
        %v445 = vsel %vm443, %v442, 0
        %v448 = vsel %vm391, %v389, 0
        %v451 = vsel %vm391, %v390, 0
        %v454 = vsel %vm391, %v387, 0
        %456 = vmatprep.subr.bf16.mxu0 %v413
        %457 = vmatpush1.bf16.msra.mxu0 %v410
        %458 = vmatprep.subr.bf16.mxu0 %v437
        %459 = vmatpush1.bf16.msra.mxu0 %v434
        %460 = vmatprep.subr.bf16.mxu0 %v451
        %461 = vmatpush1.bf16.msra.mxu0 %v448
        %462 = vmatprep.subr.bf16.mxu0 0
        %463 = vmatpush1.bf16.msra.mxu0 0
        %464 = vmatprep.subr.bf16.mxu0 0
        %465 = vmatpush1.bf16.msra.mxu0 0
        %466 = vmatprep.subr.bf16.mxu0 0
        %467 = vmatpush1.bf16.msra.mxu0 0
        %468 = vmatprep.subr.bf16.mxu0 0
        %469 = vmatpush1.bf16.msra.mxu0 0
        %470 = vmatprep.subr.bf16.mxu0 0
        %471 = vmatpush1.bf16.msra.mxu0 0
        %472 = vmatprep.subr.bf16.mxu0 0
        %473 = vmatpush1.bf16.msra.mxu0 0
        %474 = vmatprep.subr.bf16.mxu0 0
        %475 = vmatpush1.bf16.msra.mxu0 0
        %476 = vmatprep.subr.bf16.mxu0 0
        %477 = vmatpush1.bf16.msra.mxu0 0
        %478 = vmatprep.subr.bf16.mxu0 0
        %479 = vmatpush1.bf16.msra.mxu0 0
        %480 = vmatprep.subr.bf16.mxu0 0
        %481 = vmatpush1.bf16.msra.mxu0 0
        %482 = vmatprep.subr.bf16.mxu0 0
        %483 = vmatpush1.bf16.msra.mxu0 0
        %484 = vmatprep.subr.bf16.mxu0 0
        %485 = vmatpush1.bf16.msra.mxu0 0
        %486 = vmatprep.subr.bf16.mxu0 0
        %487 = vmatpush1.bf16.msra.mxu0 0
        %488 = vmatprep.mubr.bf16.mxu0 0
        %489 = vmatmul.mubr.bf16.gmra.mrb[0].mxu0 %v445
        %v490 = vpop.f32.mrb[0].mxu0
        %v491 = vadd.f32 0.0, %v490
        %v492 = vpop.f32.mrb[0].mxu0
        %v493 = vadd.f32 0.0, %v492
        %v494 = vpop.f32.mrb[0].mxu0
        %v495 = vpop.f32.mrb[0].mxu0
        %496 = vdwg.mxu0
        %497 = vmatprep.subr.bf16.mxu0 0
        %498 = vmatpush1.bf16.msra.mxu0 %v416
        %499 = vmatprep.subr.bf16.mxu0 0
        %500 = vmatpush1.bf16.msra.mxu0 %v440
        %501 = vmatprep.subr.bf16.mxu0 0
        %502 = vmatpush1.bf16.msra.mxu0 %v454
        %503 = vmatprep.subr.bf16.mxu0 0
        %504 = vmatpush1.bf16.msra.mxu0 0
        %505 = vmatprep.subr.bf16.mxu0 0
        %506 = vmatpush1.bf16.msra.mxu0 0
        %507 = vmatprep.subr.bf16.mxu0 0
        %508 = vmatpush1.bf16.msra.mxu0 0
        %509 = vmatprep.subr.bf16.mxu0 0
        %510 = vmatpush1.bf16.msra.mxu0 0
        %511 = vmatprep.subr.bf16.mxu0 0
        %512 = vmatpush1.bf16.msra.mxu0 0
        %513 = vmatprep.subr.bf16.mxu0 0
        %514 = vmatpush1.bf16.msra.mxu0 0
        %515 = vmatprep.subr.bf16.mxu0 0
        %516 = vmatpush1.bf16.msra.mxu0 0
        %517 = vmatprep.subr.bf16.mxu0 0
        %518 = vmatpush1.bf16.msra.mxu0 0
        %519 = vmatprep.subr.bf16.mxu0 0
        %520 = vmatpush1.bf16.msra.mxu0 0
        %521 = vmatprep.subr.bf16.mxu0 0
        %522 = vmatpush1.bf16.msra.mxu0 0
        %523 = vmatprep.subr.bf16.mxu0 0
        %524 = vmatpush1.bf16.msra.mxu0 0
        %525 = vmatprep.subr.bf16.mxu0 0
        %526 = vmatpush1.bf16.msra.mxu0 0
        %527 = vmatprep.subr.bf16.mxu0 0
        %528 = vmatpush1.bf16.msra.mxu0 0
        %529 = vmatprep.mubr.bf16.mxu0 0
        %530 = vmatmul.mubr.bf16.gmra.mrb[0].mxu0 %v445
        %v531 = vpop.f32.mrb[0].mxu0
        %v532 = vadd.f32 0.0, %v531
        %v533 = vpop.f32.mrb[0].mxu0
        %v534 = vpop.f32.mrb[0].mxu0
        %v535 = vpop.f32.mrb[0].mxu0
        %536 = vdwg.mxu0
        %538 = vrot.lane.b32.xlu0 %v491, 126
        %v539 = vpop.permute.xlu0 %538
        %541 = vrot.lane.b32.xlu0 %v491, 124
        %v542 = vpop.permute.xlu0 %541
        %544 = vrot.lane.b32.xlu0 %v491, 122
        %v545 = vpop.permute.xlu0 %544
        %547 = vrot.lane.b32.xlu0 %v491, 120
        %v548 = vpop.permute.xlu0 %547
        %550 = vrot.lane.b32.xlu0 %v491, 118
        %v551 = vpop.permute.xlu0 %550
        %553 = vrot.lane.b32.xlu0 %v491, 116
        %v554 = vpop.permute.xlu0 %553
        %557 = vrot.lane.b32.xlu0 %v491, 114
        %v558 = vpop.permute.xlu0 %557
        %559 = vrot.lane.b32.xlu0 %v493, 114
        %v560 = vpop.permute.xlu0 %559
        %vm561 = vcmask 932864
        %v562 = vsel %vm561, %v558, %v560
        %564 = vrot.lane.b32.xlu0 %v493, 112
        %v565 = vpop.permute.xlu0 %564
        %567 = vrot.lane.b32.xlu0 %v493, 110
        %v568 = vpop.permute.xlu0 %567
        %570 = vrot.lane.b32.xlu0 %v493, 108
        %v571 = vpop.permute.xlu0 %570
        %573 = vrot.lane.b32.xlu0 %v493, 106
        %v574 = vpop.permute.xlu0 %573
        %576 = vrot.lane.b32.xlu0 %v493, 104
        %v577 = vpop.permute.xlu0 %576
        %579 = vrot.lane.b32.xlu0 %v493, 102
        %v580 = vpop.permute.xlu0 %579
        %583 = vrot.lane.b32.xlu0 %v493, 100
        %v584 = vpop.permute.xlu0 %583
        %585 = vrot.lane.b32.xlu0 %v532, 100
        %v586 = vpop.permute.xlu0 %585
        %vm587 = vcmask 818176
        %v588 = vsel %vm587, %v584, %v586
        %590 = vrot.lane.b32.xlu0 %v532, 98
        %v591 = vpop.permute.xlu0 %590
        %vm593 = vcmask 130048
        %v594 = vsel %vm593, %v491, %v539
        %vm595 = vcmask 261120
        %v596 = vsel %vm595, %v594, %v542
        %vm597 = vcmask 392192
        %v598 = vsel %vm597, %v596, %v545
        %vm599 = vcmask 523264
        %v600 = vsel %vm599, %v598, %v548
        %vm601 = vcmask 654336
        %v602 = vsel %vm601, %v600, %v551
        %vm603 = vcmask 785408
        %v604 = vsel %vm603, %v602, %v554
        %vm605 = vcmask 916480
        %v606 = vsel %vm605, %v604, %v562
        %v607 = vsel %vm593, %v565, %v568
        %v608 = vsel %vm595, %v607, %v571
        %v609 = vsel %vm597, %v608, %v574
        %v610 = vsel %vm599, %v609, %v577
        %v611 = vsel %vm601, %v610, %v580
        %v612 = vsel %vm603, %v611, %v588
        %v613 = vsel %vm605, %v612, %v591
        %614 = vst [vmem:[%s184] sm:$0xff] %v606
        %615 = vst [vmem:[%s184 + $0x8] sm:$0xff] %v613
        %s616 = sand.u32 %s84, 1
        %s617 = scalar_lea.sflag [#allocation7], %s616
        %s618 = sand.u32 %s84, 1
        %s619 = smul.addr %s618, 16
        %s620 = scalar_lea.vmem [#allocation10], %s619
        // Predicated region
        $region37: #{tpu_custom_call.1} parent=27 // pred_check
          %p621 = pneg %p94
        $region38: #{tpu_custom_call.1} parent=27 // pred_check_branch
          %623 = sbr.rel (%p621) target = $region40
        $region39: #{tpu_custom_call.1} parent=27 // pred_region
          %s625 = ssub.s32 256, 256
          %626 = vsyncadd %s617, %s625
          %s627 = smul.addr %s22, 2
          %s628 = smul.addr %s627, 128
          %s629 = scalar_lea.hbm %s3, %s628
          %s631 = sshll.u32 %s620, 4
          %s632 = int_to_ptr.vmem [resolvable:$true] %s631
          %634 = dma.vmem_to_hbm [thread:$0]  %s632, 256, %s629, %s617
        $region40: #{tpu_custom_call.1} parent=27 // pred_fallthru
          _
      $region28: #{tpu_custom_call.1} parent=5 // pred_fallthru
        _
      %p635 = scmp.le.s32.totalorder 2, %s17
      // Predicated region
      $region41: #{tpu_custom_call.1} parent=5 // pred_check
        %p636 = pneg %p635
      $region42: #{tpu_custom_call.1} parent=5 // pred_check_branch
        %638 = sbr.rel (%p636) target = $region44
      $region43: #{tpu_custom_call.1} parent=5 // pred_region
        %s639 = ssub.s32 %s17, 2
        // Predicated region
        $region45: #{tpu_custom_call.1} parent=43 // pred_check
          %p640 = pneg %p100
        $region46: #{tpu_custom_call.1} parent=43 // pred_check_branch
          %642 = sbr.rel (%p640) target = $region48
        $region47: #{tpu_custom_call.1} parent=43 // pred_region
          %s643 = sand.u32 %s85, 1
          %s644 = scalar_lea.sflag [#allocation7], %s643
          %s645 = sand.u32 %s85, 1
          %s646 = smul.addr %s645, 16
          %s647 = scalar_lea.vmem [#allocation10], %s646
          %648 = dma.done %s644, 256
        $region48: #{tpu_custom_call.1} parent=43 // pred_fallthru
          _
      $region44: #{tpu_custom_call.1} parent=5 // pred_fallthru
        _
    $region6: #{tpu_custom_call.1} parent=1 // loop_footer
      %s21 = sadd.s32 1, %s17
    $region7: #{tpu_custom_call.1} parent=1 // loop_footer_branch
      %16 = sbr.rel target = $region3
    $region8: #{tpu_custom_call.1} parent=1 // loop_exit
      _
    %649 = vsyncpa [#allocation6], 1
    %s650 = scalar_lea.sflag [#allocation6], 1
    %651 = vsyncpa %s650, 1
    %652 = vsyncpa [#allocation9], 1
    %653 = vsyncpa [#allocation7], 1
    %s654 = scalar_lea.sflag [#allocation7], 1
    %655 = vsyncpa %s654, 1

</llo_original>
